<compile_context>
chip_gen: v7x
topology: tpu7x:2x2x1
jax: 0.10.0
libtpu: 0.0.40
codegen_flags: <defaults>
</compile_context>

<pallas_src>
import functools

import jax
import jax.numpy as jnp
from jax.experimental import pallas as pl
from jax.experimental.pallas import tpu as pltpu


def _round_up(x, m):
    return ((x + m - 1) // m) * m


# ---------------------------------------------------------------------------
# Kernels
# ---------------------------------------------------------------------------

def _adain_stats_fullrow_kernel(x_ref, mean_ref, std_ref, *, n_true):
    """Whole-row block: exact two-pass mean / centered unbiased variance."""
    x = x_ref[...].astype(jnp.float32)                  # (TILE_R, N)
    mean = jnp.mean(x, axis=-1, keepdims=True)          # (TILE_R, 1)
    d = x - mean
    denom = 1.0 / float(max(n_true - 1, 1))             # torch.std -> ddof=1
    var = jnp.sum(d * d, axis=-1, keepdims=True) * denom
    mean_ref[...] = mean
    std_ref[...] = jnp.sqrt(var)


def _adain_stats_tiled_kernel(x_ref, mean_ref, std_ref, *,
                              n_true, tile_n, n_tiles, has_tail):
    """Tiled-N fallback (very large H*W).

    Per-tile centered stats merged with Chan's parallel update. The running
    mean is accumulated directly in mean_ref and the running M2 in std_ref
    (both output blocks are resident across the N axis); std_ref is converted
    to the unbiased std in place on the last tile. The OOB lane mask is only
    executed on the tail tile.
    """
    n_idx = pl.program_id(1)
    is_last = n_idx == n_tiles - 1

    @pl.when(n_idx == 0)
    def _init():
        mean_ref[...] = jnp.zeros_like(mean_ref)
        std_ref[...] = jnp.zeros_like(std_ref)

    x = x_ref[...].astype(jnp.float32)                  # (TILE_R, TILE_N)

    def merge(mu_t, m2_t, cnt_t):
        cnt_prev = (n_idx * tile_n).astype(jnp.float32)  # elems seen so far
        tot = cnt_prev + cnt_t
        w = cnt_t / tot
        delta = mu_t - mean_ref[...]
        mean_ref[...] = mean_ref[...] + delta * w
        std_ref[...] = std_ref[...] + m2_t + (delta * delta) * (cnt_prev * w)

    def full_tile():
        mu = jnp.mean(x, axis=-1, keepdims=True)
        d = x - mu
        merge(mu, jnp.sum(d * d, axis=-1, keepdims=True), float(tile_n))

    if has_tail:  # static: only emitted when TILE_N does not divide N
        tail_cnt = n_true - (n_tiles - 1) * tile_n       # static python int

        @pl.when(jnp.logical_not(is_last))
        def _interior():
            full_tile()

        @pl.when(is_last)   # mask VALU work only on the tail tile
        def _tail():
            col = jax.lax.broadcasted_iota(jnp.int32, x.shape, 1)
            valid = col < tail_cnt
            s = jnp.sum(jnp.where(valid, x, 0.0), axis=-1, keepdims=True)
            mu = s * (1.0 / tail_cnt)
            d = jnp.where(valid, x - mu, 0.0)
            merge(mu, jnp.sum(d * d, axis=-1, keepdims=True), float(tail_cnt))
    else:
        full_tile()

    @pl.when(is_last)
    def _finalize():
        denom = 1.0 / float(max(n_true - 1, 1))
        std_ref[...] = jnp.sqrt(jnp.maximum(std_ref[...], 0.0) * denom)


# ---------------------------------------------------------------------------
# Wrapper
# ---------------------------------------------------------------------------

# Per-input-block VMEM budget.  Double-buffered input (2x block) plus the tiny
# (R,1) outputs stays well inside the 48 MiB scoped limit below, which itself
# leaves headroom on v7x's 64 MiB physical VMEM (v5e/v6e have 128 MiB).
_BLOCK_BYTES = 12 * 1024 * 1024
_TILE_N_CAP = 8192            # multiple of 128; tiled-N fallback only
_TILE_R_CAP = 512
_VMEM_LIMIT = 48 * 1024 * 1024


def adain_stats(x, *, block_bytes=_BLOCK_BYTES, tile_n_cap=_TILE_N_CAP):
    """Per-row (mean, unbiased std) of a (R, N) array via a Pallas TPU kernel."""
    R, N = x.shape
    itemsize = jnp.dtype(x.dtype).itemsize
    # Sublane packing: 8 rows per (8,128) tile for 4-byte dtypes, 16 for 2-byte,
    # 32 for 1-byte inputs.
    row_align = {4: 8, 2: 16, 1: 32}.get(itemsize, 8)
    tile_n_cap = _round_up(tile_n_cap, 128)
    n_pad = _round_up(N, 128)

    # Full-row mode whenever at least row_align full rows fit the block budget.
    full_row = n_pad * row_align * itemsize <= block_bytes
    if full_row:
        tile_n = N                      # == full array dim: no alignment issue
        footprint_cols = n_pad
    else:
        tile_n = min(tile_n_cap, n_pad)  # multiple of 128
        footprint_cols = tile_n

    max_rows = (block_bytes // (footprint_cols * itemsize)) // row_align * row_align
    max_rows = max(max_rows, row_align)
    # Aim for >= 2 row tiles so both v7x TensorCores get work ("parallel" row
    # axis is the only megacore-shardable axis here).  No effect on v5e/v6e.
    half_rows = _round_up(pl.cdiv(R, 2), row_align)
    tile_r = min(_TILE_R_CAP, max_rows, half_rows, _round_up(R, row_align))
    tile_r = max(tile_r, row_align)

    row_tiles = pl.cdiv(R, tile_r)
    out_shape = (jax.ShapeDtypeStruct((R, 1), jnp.float32),
                 jax.ShapeDtypeStruct((R, 1), jnp.float32))
    cost = pl.CostEstimate(
        flops=5 * R * N,
        transcendentals=R,
        bytes_accessed=R * N * itemsize + 2 * R * 4,
    )

    if full_row:
        kernel = functools.partial(_adain_stats_fullrow_kernel, n_true=N)
        grid_spec = pltpu.PrefetchScalarGridSpec(
            num_scalar_prefetch=0,
            grid=(row_tiles,),
            in_specs=[pl.BlockSpec((tile_r, N), lambda r: (r, 0))],
            out_specs=(
                pl.BlockSpec((tile_r, 1), lambda r: (r, 0)),
                pl.BlockSpec((tile_r, 1), lambda r: (r, 0)),
            ),
        )
        dim_sem = ("parallel",)
    else:
        n_tiles = pl.cdiv(N, tile_n)
        kernel = functools.partial(
            _adain_stats_tiled_kernel, n_true=N, tile_n=tile_n,
            n_tiles=n_tiles, has_tail=(N % tile_n) != 0)
        grid_spec = pltpu.PrefetchScalarGridSpec(
            num_scalar_prefetch=0,
            grid=(row_tiles, n_tiles),
            in_specs=[pl.BlockSpec((tile_r, tile_n), lambda r, n: (r, n))],
            out_specs=(
                pl.BlockSpec((tile_r, 1), lambda r, n: (r, 0)),
                pl.BlockSpec((tile_r, 1), lambda r, n: (r, 0)),
            ),
        )
        dim_sem = ("parallel", "arbitrary")

    mean, std = pl.pallas_call(
        kernel,
        out_shape=out_shape,
        grid_spec=grid_spec,
        compiler_params=pltpu.CompilerParams(
            dimension_semantics=dim_sem,
            vmem_limit_bytes=_VMEM_LIMIT,
        ),
        cost_estimate=cost,
    )(x)
    return mean[:, 0], std[:, 0]


class HParams:
    """Minimal stand-in for the module's hparams."""

    def __init__(self, styleGANmod=False):
        self.styleGANmod = styleGANmod


def adain_forward(f_vol, hparams):
    """JAX/Pallas equivalent of AdaIN.forward for an NCHW f_vol."""
    B, C, H, W = f_vol.shape
    x = f_vol.reshape(B * C, H * W)   # contiguous reshape, free in XLA
    mean, std = adain_stats(x)

    # Degenerate-channel resampling: the reference adds N(0, 1e-8) noise while
    # any channel has exactly-zero std.  Data-dependent trip count, so it can
    # only run eagerly.  TODO(synk): under jit/trace this loop is skipped.
    try:
        degenerate = bool(jnp.min(std) == 0.0)
    except Exception:
        degenerate = False
    key = jax.random.PRNGKey(1)
    while degenerate:
        key, sub = jax.random.split(key)
        noise = jax.random.normal(sub, x.shape, dtype=jnp.float32) * 1e-8
        x = x + noise.astype(x.dtype)
        mean, std = adain_stats(x)
        degenerate = bool(jnp.min(std) == 0.0)

    mean = mean.reshape(B, C).astype(f_vol.dtype)
    std = std.reshape(B, C).astype(f_vol.dtype)
    if hparams.styleGANmod:
        return std
    return jnp.concatenate([mean, std], axis=-1)


if __name__ == "__main__":
    key = jax.random.PRNGKey(0)
    B, C, H, W = 2, 4, 16, 16
    f_vol = jax.random.normal(key, (B, C, H, W), dtype=jnp.float32)

    out = jax.block_until_ready(adain_forward(f_vol, HParams(styleGANmod=False)))
    xr = f_vol.reshape(B, C, H * W)
    ref_mean = jnp.mean(xr, axis=2)
    ref_std = jnp.std(xr, axis=2, ddof=1)
    ref = jnp.concatenate([ref_mean, ref_std], axis=-1)
    assert out.shape == (B, 2 * C)
    assert jnp.allclose(out, ref, atol=1e-4, rtol=1e-4)

    # styleGANmod=True path
    out_std = jax.block_until_ready(adain_forward(f_vol, HParams(styleGANmod=True)))
    assert out_std.shape == (B, C)
    assert jnp.allclose(out_std, ref_std, atol=1e-4, rtol=1e-4)

    # Unaligned spatial size / row count exercises the unaligned full-row block
    # and the partial output row-block path.
    B2, C2, H2, W2 = 2, 3, 15, 15
    f2 = jax.random.normal(jax.random.PRNGKey(2), (B2, C2, H2, W2),
                           dtype=jnp.float32)
    out2 = jax.block_until_ready(adain_forward(f2, HParams(styleGANmod=False)))
    xr2 = f2.reshape(B2, C2, H2 * W2)
    ref2 = jnp.concatenate(
        [jnp.mean(xr2, axis=2), jnp.std(xr2, axis=2, ddof=1)], axis=-1)
    assert out2.shape == (B2, 2 * C2)
    assert jnp.allclose(out2, ref2, atol=1e-4, rtol=1e-4)

    # Tiled-N fallback path (forced small block budget): Chan merge + tail mask.
    xt = jax.random.normal(jax.random.PRNGKey(3), (20, 1000), dtype=jnp.float32)
    mt, st = jax.block_until_ready(
        adain_stats(xt, block_bytes=8 * 1024, tile_n_cap=256))
    assert jnp.allclose(mt, jnp.mean(xt, axis=1), atol=1e-4, rtol=1e-4)
    assert jnp.allclose(st, jnp.std(xt, axis=1, ddof=1), atol=1e-4, rtol=1e-4)

    # Degenerate (all-zero) channel exercises the eager resampling loop.
    f3 = f_vol.at[0, 0].set(0.0)
    out3 = jax.block_until_ready(adain_forward(f3, HParams(styleGANmod=True)))
    assert bool(jnp.min(out3) > 0.0)

    print("KERNEL_OK")
</pallas_src>

<mosaic_0001>
module attributes {stable_mosaic.version = 11 : i64} {
  func.func @_adain_stats_fullrow_kernel(%arg0: i32, %arg1: memref<8x256xf32, #tpu.memory_space<vmem>>, %arg2: memref<8x1xf32, #tpu.memory_space<vmem>>, %arg3: memref<8x1xf32, #tpu.memory_space<vmem>>) attributes {dimension_semantics = [#tpu.dimension_semantics<parallel>], iteration_bounds = array<i64: 1>, scalar_prefetch = 0 : i64, scratch_operands = 0 : i64, tpu.core_type = #tpu.core_type<tc>, window_params = [{transform_indices = @transform_0, window_bounds = array<i64: 8, 256>}, {transform_indices = @transform_1, window_bounds = array<i64: 8, 1>}, {transform_indices = @transform_2, window_bounds = array<i64: 8, 1>}]} {
    %c0 = arith.constant 0 : index
    %c0_0 = arith.constant 0 : index
    %0 = vector.load %arg1[%c0, %c0_0] : memref<8x256xf32, #tpu.memory_space<vmem>>, vector<8x256xf32>
    %cst = arith.constant dense<0.000000e+00> : vector<8xf32>
    %1 = vector.multi_reduction <add>, %0, %cst [1] : vector<8x256xf32> to vector<8xf32>
    %2 = vector.shape_cast %1 : vector<8xf32> to vector<8x1xf32>
    %cst_1 = arith.constant 2.560000e+02 : f32
    %3 = vector.broadcast %cst_1 : f32 to vector<8x1xf32>
    %4 = arith.divf %2, %3 : vector<8x1xf32>
    %5 = vector.broadcast %4 : vector<8x1xf32> to vector<8x256xf32>
    %6 = arith.subf %0, %5 : vector<8x256xf32>
    %7 = arith.mulf %6, %6 : vector<8x256xf32>
    %cst_2 = arith.constant dense<0.000000e+00> : vector<8xf32>
    %8 = vector.multi_reduction <add>, %7, %cst_2 [1] : vector<8x256xf32> to vector<8xf32>
    %9 = vector.shape_cast %8 : vector<8xf32> to vector<8x1xf32>
    %cst_3 = arith.constant 0.00392156886 : f32
    %10 = vector.broadcast %cst_3 : f32 to vector<8x1xf32>
    %11 = arith.mulf %9, %10 : vector<8x1xf32>
    %c0_4 = arith.constant 0 : index
    %c0_5 = arith.constant 0 : index
    %12 = vector.load %arg2[%c0_4, %c0_5] : memref<8x1xf32, #tpu.memory_space<vmem>>, vector<8x1xf32>
    tpu.vector_store %arg2[%c0_4, %c0_5], %4 {strides = array<i32>} : memref<8x1xf32, #tpu.memory_space<vmem>>, vector<8x1xf32>,
    %13 = math.sqrt %11 : vector<8x1xf32>
    %c0_6 = arith.constant 0 : index
    %c0_7 = arith.constant 0 : index
    %14 = vector.load %arg3[%c0_6, %c0_7] : memref<8x1xf32, #tpu.memory_space<vmem>>, vector<8x1xf32>
    tpu.vector_store %arg3[%c0_6, %c0_7], %13 {strides = array<i32>} : memref<8x1xf32, #tpu.memory_space<vmem>>, vector<8x1xf32>,
    return
  }
  func.func @transform_0(%arg0: i32) -> (i32, i32) {
    %c0_i32 = arith.constant 0 : i32
    %c0_i32_0 = arith.constant 0 : i32
    return %arg0, %c0_i32 : i32, i32
  }
  func.func @transform_1(%arg0: i32) -> (i32, i32) {
    %c0_i32 = arith.constant 0 : i32
    %c0_i32_0 = arith.constant 0 : i32
    return %arg0, %c0_i32 : i32, i32
  }
  func.func @transform_2(%arg0: i32) -> (i32, i32) {
    %c0_i32 = arith.constant 0 : i32
    %c0_i32_0 = arith.constant 0 : i32
    return %arg0, %c0_i32 : i32, i32
  }
}

</mosaic_0001>

<llo_original>
// kernel: tpu_custom_call.1
$region0: #{tpu_custom_call.1}
  #allocation0 [shape = 'u32[]', space=smem, size = 0x4, offset = 0x4, fixed_abs, tag = 'smem constant byte address 0x4 - core index']
  #allocation1 [shape = 'u32[144,128]{1,0:T(1,128)}', space=vmem, size = 0x12000, scoped, tag = 'internal scratch']
  %s0 = inlined_call_operand.hbm [shape: f32[8,256], index: 0, kind: input, shape index: {}]
  %s1 = inlined_call_operand.vmem [shape: f32[8,1], index: 1, kind: output, shape index: {0}]
  %s2 = inlined_call_operand.vmem [shape: f32[8,1], index: 2, kind: output, shape index: {1}]
  %3 = xla_tuple %s1, %s2
  %s4 = sld [smem:[#allocation0]]
  $region26: #{tpu_custom_call.1} parent=0
    _
  %s6 = ssub.s32 1, %s4
  %s7 = scalar_select 0, %s6, %s4
  $region1: #{tpu_custom_call.1} parent=0
    #allocation2 [shape = 'u8[8192]{0}', space=vmem, size = 0x2000, scoped, tag = 'input window, operand 0, single buffered']
    #allocation3 [shape = 's32[1]{0}', space=sflag, size = 0x4, scoped, tag = 'scoped memory for tpu_custom_call.1']
    %8 = vsyncpa [#allocation3], 0
    // Predicated region
    $region2: #{tpu_custom_call.1} parent=1 // pred_check
      _
    $region3: #{tpu_custom_call.1} parent=1 // pred_check_branch
      %10 = sbr.rel (0) target = $region5
    $region4: #{tpu_custom_call.1} parent=1 // pred_region
      %s12 = ssub.s32 256, 256
      %13 = vsyncadd [#allocation3], %s12
      %s15 = sshll.u32 [#allocation2], 4
      %s16 = int_to_ptr.vmem [resolvable:$true] %s15
      %18 = dma.hbm_to_vmem [thread:$0]  %s0, 256, %s16, [#allocation3]
    $region5: #{tpu_custom_call.1} parent=1 // pred_fallthru
      _
    // Predicated region
    $region6: #{tpu_custom_call.1} parent=1 // pred_check
      _
    $region7: #{tpu_custom_call.1} parent=1 // pred_check_branch
      %20 = sbr.rel (0) target = $region9
    $region8: #{tpu_custom_call.1} parent=1 // pred_region
      %21 = dma.done [#allocation3], 256
    $region9: #{tpu_custom_call.1} parent=1 // pred_fallthru
      _
    %v22 = vld [vmem:[#allocation2] sm:$0xff]
    %v23 = vld [vmem:[#allocation2 + $0x8] sm:$0xff]
    %v24 = vadd.f32 %v22, %v23
    %25 = vadd.xlane.f32.xlu0 %v24
    %v26 = vpop.xlane.xlu0 %25
    %v27 = vrcp.pop 256.0
    %v28 = vmul.f32 %v26, %v27
    %v29 = vsub.f32 %v22, %v28
    %v30 = vsub.f32 %v23, %v28
    %v31 = vmul.f32 %v29, %v29
    %v32 = vmul.f32 %v30, %v30
    %v33 = vadd.f32 %v31, %v32
    %34 = vadd.xlane.f32.xlu0 %v33
    %v35 = vpop.xlane.xlu0 %34
    %v36 = vmul.f32 %v35, 0.003921569
    %vm37 = vcmask 7168
    %38 = vst.msk [vmem:[%s1] sm:$0xff] %vm37, %v28
    %v39 = vrsqrt.pop %v36
    %v40 = vmul.f32 %v36, %v39
    %vm41 = vcmp.eq.f32.partialorder %v36, inf
    %v42 = vsel %vm41, %v36, %v40
    %vm43 = vcmp.eq.f32.partialorder %v36, 0.0
    %v44 = vand.u32 %v36, 2147483648
    %v45 = vsel %vm43, %v44, %v42
    %46 = vst.msk [vmem:[%s2] sm:$0xff] %vm37, %v45
    // Predicated region
    $region10: #{tpu_custom_call.1} parent=1 // pred_check
      _
    $region11: #{tpu_custom_call.1} parent=1 // pred_check_branch
      %48 = sbr.rel (0) target = $region13
    $region12: #{tpu_custom_call.1} parent=1 // pred_region
      _
    $region13: #{tpu_custom_call.1} parent=1 // pred_fallthru
      _
    // Predicated region
    $region14: #{tpu_custom_call.1} parent=1 // pred_check
      _
    $region15: #{tpu_custom_call.1} parent=1 // pred_check_branch
      %50 = sbr.rel (0) target = $region17
    $region16: #{tpu_custom_call.1} parent=1 // pred_region
      _
    $region17: #{tpu_custom_call.1} parent=1 // pred_fallthru
      _
    // Predicated region
    $region18: #{tpu_custom_call.1} parent=1 // pred_check
      _
    $region19: #{tpu_custom_call.1} parent=1 // pred_check_branch
      %52 = sbr.rel (0) target = $region21
    $region20: #{tpu_custom_call.1} parent=1 // pred_region
      _
    $region21: #{tpu_custom_call.1} parent=1 // pred_fallthru
      _
    // Predicated region
    $region22: #{tpu_custom_call.1} parent=1 // pred_check
      _
    $region23: #{tpu_custom_call.1} parent=1 // pred_check_branch
      %54 = sbr.rel (0) target = $region25
    $region24: #{tpu_custom_call.1} parent=1 // pred_region
      _
    $region25: #{tpu_custom_call.1} parent=1 // pred_fallthru
      _
    %55 = vsyncpa [#allocation3], 1

</llo_original>
